<compile_context>
chip_gen: v6e
topology: v6e:2x2x1
jax: 0.10.0
libtpu: 0.0.40
codegen_flags: <defaults>
</compile_context>

<pallas_src>
import jax
import jax.numpy as jnp
from jax.experimental import pallas as pl
from jax.experimental.pallas import tpu as pltpu

DROPOUT_PROB = 0.5


def _mc_dropout_kernel(x_ref, factor_ref, o_ref):
    """Elementwise broadcast-multiply: out = x * factor (factor shared over B).

    x_ref:      [TB, K, F]  input tile
    factor_ref: [K, F]      multiplicative mask (0 or 1/(1-p)) in x dtype;
                            same block at every grid step -> broadcast over B
    o_ref:      [TB, K, F]  output tile
    """
    o_ref[...] = x_ref[...] * factor_ref[...][None, :, :]


def _pick_tb(b, k, f, itemsize, target_bytes=4 * 1024 * 1024):
    """Pick a B-tile so each block is ~4 MiB (good DMA pipelining, VMEM-safe)."""
    per_row = max(k * f * itemsize, 1)
    tb = max(1, target_bytes // per_row)
    return int(min(b, tb))


def mc_dropout(x_flat, k, key, p=DROPOUT_PROB):
    """Pallas equivalent of _MCDropout.forward.

    x_flat: [B*K, F] input (already "mc_tensor"-expanded, as in BayesianModule).
    k:      number of MC samples (BayesianModule.k).
    key:    jax PRNG key controlling the Bernoulli mask (sampled once, shared
            across the B dimension).
    """
    if p == 0.0:  # PyTorch early-exit
        return x_flat

    n, f = x_flat.shape
    assert n % k == 0, "leading dim must be B*K"
    b = n // k
    x = x_flat.reshape(b, k, f)  # unflatten_tensor

    # Mask sampled once with shape [K, F] (== [1, K, *sample_shape] broadcast
    # over B), converted to a multiplicative factor and cast to the input dtype
    # so the kernel is a single native-dtype vmul.
    drop = jax.random.bernoulli(key, p=p, shape=(k, f))  # True -> zero it
    factor = jnp.where(drop, jnp.float32(0.0), jnp.float32(1.0 / (1.0 - p)))
    factor = factor.astype(x.dtype)

    tb = _pick_tb(b, k, f, jnp.dtype(x.dtype).itemsize)
    grid = (pl.cdiv(b, tb),)

    out = pl.pallas_call(
        _mc_dropout_kernel,
        out_shape=jax.ShapeDtypeStruct((b, k, f), x.dtype),
        grid=grid,
        in_specs=[
            # x: tile over B; last two block dims are the full (K, F) extents,
            # so the (8, 128) tiling constraint is satisfied for any K/F.
            pl.BlockSpec((tb, k, f), lambda i: (i, 0, 0)),
            # factor: same full [K, F] block at every grid step (broadcast).
            pl.BlockSpec((k, f), lambda i: (0, 0)),
        ],
        out_specs=pl.BlockSpec((tb, k, f), lambda i: (i, 0, 0)),
        compiler_params=pltpu.CompilerParams(
            dimension_semantics=("parallel",),          # shard B across TCs (v7x)
            vmem_limit_bytes=64 * 1024 * 1024,
        ),
    )(x, factor)

    return out.reshape(n, f)  # flatten_tensor
    # TODO(synk): eval-mode persistent mask caching (self.mask module state) and
    # training-mode k=input.shape[0] inference are host-side module state, kept
    # outside the kernel.


if __name__ == "__main__":
    key = jax.random.PRNGKey(0)
    k_data, k_mask = jax.random.split(key)

    B, K, F = 2, 8, 128
    # simulate BayesianModule.mc_tensor: expand a [B, F] batch K times -> [B*K, F]
    base = jax.random.normal(k_data, (B, F), dtype=jnp.float32)
    x_flat = jnp.broadcast_to(base[:, None, :], (B, K, F)).reshape(B * K, F)

    out = mc_dropout(x_flat, k=K, key=k_mask, p=DROPOUT_PROB)
    out = jax.block_until_ready(out)

    # reference: same mask sampling, pure JAX
    drop_ref = jax.random.bernoulli(k_mask, p=DROPOUT_PROB, shape=(K, F))
    ref = jnp.where(
        drop_ref[None, :, :],
        jnp.float32(0.0),
        x_flat.reshape(B, K, F) / (1.0 - DROPOUT_PROB),
    ).reshape(B * K, F).astype(x_flat.dtype)

    assert out.shape == x_flat.shape
    assert bool(jnp.allclose(out, ref, rtol=1e-6, atol=1e-6))
    # mask must be shared (broadcast) across the B dimension
    out3 = out.reshape(B, K, F)
    assert bool(jnp.all((out3[0] == 0.0) == (out3[1] == 0.0)))

    print("KERNEL_OK")
</pallas_src>

<mosaic_0001>
module attributes {stable_mosaic.version = 11 : i64} {
  func.func @_mc_dropout_kernel(%arg0: i32, %arg1: memref<2x8x128xf32, #tpu.memory_space<vmem>>, %arg2: memref<8x128xf32, #tpu.memory_space<vmem>>, %arg3: memref<2x8x128xf32, #tpu.memory_space<vmem>>) attributes {dimension_semantics = [#tpu.dimension_semantics<parallel>], iteration_bounds = array<i64: 1>, scalar_prefetch = 0 : i64, scratch_operands = 0 : i64, tpu.core_type = #tpu.core_type<tc>, window_params = [{transform_indices = @transform_0, window_bounds = array<i64: 2, 8, 128>}, {pipeline_mode = #tpu.pipeline_mode<synchronous>, transform_indices = @transform_1, window_bounds = array<i64: 8, 128>}, {transform_indices = @transform_2, window_bounds = array<i64: 2, 8, 128>}]} {
    %c0 = arith.constant 0 : index
    %c0_0 = arith.constant 0 : index
    %c0_1 = arith.constant 0 : index
    %0 = vector.load %arg1[%c0, %c0_0, %c0_1] : memref<2x8x128xf32, #tpu.memory_space<vmem>>, vector<2x8x128xf32>
    %c0_2 = arith.constant 0 : index
    %c0_3 = arith.constant 0 : index
    %1 = vector.load %arg2[%c0_2, %c0_3] : memref<8x128xf32, #tpu.memory_space<vmem>>, vector<8x128xf32>
    %2 = vector.shape_cast %1 : vector<8x128xf32> to vector<1x8x128xf32>
    %3 = vector.broadcast %2 : vector<1x8x128xf32> to vector<2x8x128xf32>
    %4 = arith.mulf %0, %3 : vector<2x8x128xf32>
    %c0_4 = arith.constant 0 : index
    %c0_5 = arith.constant 0 : index
    %c0_6 = arith.constant 0 : index
    %5 = vector.load %arg3[%c0_4, %c0_5, %c0_6] : memref<2x8x128xf32, #tpu.memory_space<vmem>>, vector<2x8x128xf32>
    tpu.vector_store %arg3[%c0_4, %c0_5, %c0_6], %4 {strides = array<i32>} : memref<2x8x128xf32, #tpu.memory_space<vmem>>, vector<2x8x128xf32>,
    return
  }
  func.func @transform_0(%arg0: i32) -> (i32, i32, i32) {
    %c0_i32 = arith.constant 0 : i32
    %c0_i32_0 = arith.constant 0 : i32
    %c0_i32_1 = arith.constant 0 : i32
    return %arg0, %c0_i32, %c0_i32_0 : i32, i32, i32
  }
  func.func @transform_1(%arg0: i32) -> (i32, i32) {
    %c0_i32 = arith.constant 0 : i32
    %c0_i32_0 = arith.constant 0 : i32
    %c0_i32_1 = arith.constant 0 : i32
    return %c0_i32, %c0_i32_0 : i32, i32
  }
  func.func @transform_2(%arg0: i32) -> (i32, i32, i32) {
    %c0_i32 = arith.constant 0 : i32
    %c0_i32_0 = arith.constant 0 : i32
    %c0_i32_1 = arith.constant 0 : i32
    return %arg0, %c0_i32, %c0_i32_0 : i32, i32, i32
  }
}

</mosaic_0001>

<llo_original>
// kernel: tpu_custom_call.1
$region0: #{tpu_custom_call.1}
  #allocation0 [shape = 'u32[]', space=smem, size = 0x4, offset = 0x4, fixed_abs, tag = 'smem constant byte address 0x4 - core index']
  #allocation1 [shape = 'u32[144,128]{1,0:T(1,128)}', space=vmem, size = 0x12000, scoped, tag = 'internal scratch']
  %s0 = inlined_call_operand.hbm [shape: f32[2,8,128], index: 0, kind: input, shape index: {}]
  %s1 = inlined_call_operand.hbm [shape: f32[8,128], index: 1, kind: input, shape index: {}]
  %s2 = inlined_call_operand.hbm [shape: f32[2,8,128], index: 2, kind: output, shape index: {}]
  %s3 = sld [smem:[#allocation0]]
  $region26: #{tpu_custom_call.1} parent=0
    _
  %s5 = ssub.s32 1, %s3
  %s6 = scalar_select 0, %s5, %s3
  $region1: #{tpu_custom_call.1} parent=0
    #allocation2 [shape = 'u8[8192]{0}', space=vmem, size = 0x2000, scoped, tag = 'input window, operand 0, single buffered']
    #allocation3 [shape = 's32[1]{0}', space=sflag, size = 0x4, scoped, tag = 'scoped memory for tpu_custom_call.1']
    #allocation4 [shape = 's32[1]{0}', space=sflag, size = 0x4, scoped, tag = 'scoped memory for tpu_custom_call.1']
    #allocation5 [shape = 'u8[4096]{0}', space=vmem, size = 0x1000, scoped, tag = 'input window, operand 1, single buffered']
    #allocation6 [shape = 's32[1]{0}', space=sflag, size = 0x4, scoped, tag = 'scoped memory for tpu_custom_call.1']
    #allocation7 [shape = 'u8[8192]{0}', space=vmem, size = 0x2000, scoped, tag = 'output window, operand 0, single buffered']
    %7 = vsyncpa [#allocation3], 0
    %8 = vsyncpa [#allocation6], 0
    %9 = vsyncpa [#allocation4], 0
    // Predicated region
    $region2: #{tpu_custom_call.1} parent=1 // pred_check
      _
    $region3: #{tpu_custom_call.1} parent=1 // pred_check_branch
      %11 = sbr.rel (0) target = $region5
    $region4: #{tpu_custom_call.1} parent=1 // pred_region
      %s13 = ssub.s32 256, 256
      %14 = vsyncadd [#allocation3], %s13
      %s15 = sshll.u32 [#allocation2], 4
      %s16 = int_to_ptr.vmem [resolvable:$true] %s15
      %21 = dma.hbm_to_vmem [thread:$0]  %s0, 256, %s16, [#allocation3], 128, 128, 8
    $region5: #{tpu_custom_call.1} parent=1 // pred_fallthru
      _
    // Predicated region
    $region6: #{tpu_custom_call.1} parent=1 // pred_check
      _
    $region7: #{tpu_custom_call.1} parent=1 // pred_check_branch
      %23 = sbr.rel (0) target = $region9
    $region8: #{tpu_custom_call.1} parent=1 // pred_region
      %s25 = ssub.s32 128, 128
      %26 = vsyncadd [#allocation6], %s25
      %s28 = sshll.u32 [#allocation5], 4
      %s29 = int_to_ptr.vmem [resolvable:$true] %s28
      %31 = dma.hbm_to_vmem [thread:$0]  %s1, 128, %s29, [#allocation6]
    $region9: #{tpu_custom_call.1} parent=1 // pred_fallthru
      _
    // Predicated region
    $region10: #{tpu_custom_call.1} parent=1 // pred_check
      _
    $region11: #{tpu_custom_call.1} parent=1 // pred_check_branch
      %33 = sbr.rel (0) target = $region13
    $region12: #{tpu_custom_call.1} parent=1 // pred_region
      %34 = dma.done [#allocation3], 256
    $region13: #{tpu_custom_call.1} parent=1 // pred_fallthru
      _
    // Predicated region
    $region14: #{tpu_custom_call.1} parent=1 // pred_check
      _
    $region15: #{tpu_custom_call.1} parent=1 // pred_check_branch
      %36 = sbr.rel (0) target = $region17
    $region16: #{tpu_custom_call.1} parent=1 // pred_region
      %37 = dma.done [#allocation6], 128
    $region17: #{tpu_custom_call.1} parent=1 // pred_fallthru
      _
    %v38 = vld [vmem:[#allocation2] sm:$0xff]
    %v39 = vld [vmem:[#allocation2 + $0x8] sm:$0xff]
    %v40 = vld [vmem:[#allocation5] sm:$0xff]
    %v41 = vmul.f32 %v38, %v40
    %v42 = vmul.f32 %v39, %v40
    %43 = vst [vmem:[#allocation7] sm:$0xff] %v41
    %44 = vst [vmem:[#allocation7 + $0x8] sm:$0xff] %v42
    // Predicated region
    $region18: #{tpu_custom_call.1} parent=1 // pred_check
      _
    $region19: #{tpu_custom_call.1} parent=1 // pred_check_branch
      %46 = sbr.rel (0) target = $region21
    $region20: #{tpu_custom_call.1} parent=1 // pred_region
      %s48 = ssub.s32 256, 256
      %49 = vsyncadd [#allocation4], %s48
      %s50 = sshll.u32 [#allocation7], 4
      %s51 = int_to_ptr.vmem [resolvable:$true] %s50
      %56 = dma.vmem_to_hbm [thread:$0]  %s51, 256, %s2, [#allocation4], 128, 128, 8
    $region21: #{tpu_custom_call.1} parent=1 // pred_fallthru
      _
    // Predicated region
    $region22: #{tpu_custom_call.1} parent=1 // pred_check
      _
    $region23: #{tpu_custom_call.1} parent=1 // pred_check_branch
      %58 = sbr.rel (0) target = $region25
    $region24: #{tpu_custom_call.1} parent=1 // pred_region
      %59 = dma.done [#allocation4], 256
    $region25: #{tpu_custom_call.1} parent=1 // pred_fallthru
      _
    %60 = vsyncpa [#allocation3], 1
    %61 = vsyncpa [#allocation6], 1
    %62 = vsyncpa [#allocation4], 1

</llo_original>
